<compile_context>
chip_gen: v6e
topology: v6e:2x2x1
jax: 0.10.0
libtpu: 0.0.40
codegen_flags: <defaults>
</compile_context>

<pallas_src>
import functools

import jax
import jax.numpy as jnp
import numpy as np
from jax.experimental import pallas as pl
from jax.experimental.pallas import tpu as pltpu

DEFAULT_BETA = 100.0

_LANE_COLS = 1024   # lane-dense width, multiple of 128
_ROW_TILE = 512     # row tile for large inputs (multiple of 8 and 16)


def _soft_gate_kernel(x_ref, o_ref, *, beta):
    # Elementwise hot path: sigmoid(beta * x), computed in f32 (EUP exp path),
    # then cast back to the I/O dtype.
    x = x_ref[...].astype(jnp.float32)
    o_ref[...] = jax.nn.sigmoid(beta * x).astype(o_ref.dtype)


def soft_gate(x, beta=DEFAULT_BETA):
    """Apply sigmoid(beta * x) elementwise via a Pallas TPU kernel.

    Accepts any shape/rank (flattened internally); returns same shape/dtype.
    """
    orig_shape = x.shape
    orig_dtype = x.dtype
    total = int(np.prod(orig_shape)) if orig_shape else 1

    # Sublane multiple depends on packing (bf16 packs 16 rows per vreg).
    sub = 16 if orig_dtype == jnp.bfloat16 else 8

    cols = _LANE_COLS
    rows_needed = pl.cdiv(total, cols)
    if rows_needed >= _ROW_TILE:
        tm = _ROW_TILE
        rows = pl.cdiv(rows_needed, tm) * tm      # every block is full
    else:
        rows = pl.cdiv(rows_needed, sub) * sub    # single full-array block
        tm = rows

    padded = rows * cols
    x_flat = x.reshape(-1)
    if padded != total:
        x_flat = jnp.pad(x_flat, (0, padded - total))
    x2d = x_flat.reshape(rows, cols)

    itemsize = jnp.dtype(orig_dtype).itemsize
    kernel = functools.partial(_soft_gate_kernel, beta=float(beta))

    out2d = pl.pallas_call(
        kernel,
        out_shape=jax.ShapeDtypeStruct((rows, cols), orig_dtype),
        grid_spec=pltpu.PrefetchScalarGridSpec(
            num_scalar_prefetch=0,
            grid=(rows // tm,),
            in_specs=[pl.BlockSpec((tm, cols), lambda i: (i, 0))],
            out_specs=pl.BlockSpec((tm, cols), lambda i: (i, 0)),
        ),
        compiler_params=pltpu.CompilerParams(
            dimension_semantics=("parallel",),
        ),
        input_output_aliases={0: 0},
        cost_estimate=pl.CostEstimate(
            flops=2 * padded,
            transcendentals=padded,
            bytes_accessed=2 * padded * itemsize,
        ),
    )(x2d)

    out_flat = out2d.reshape(-1)
    if padded != total:
        out_flat = out_flat[:total]
    return out_flat.reshape(orig_shape)


if __name__ == "__main__":
    key = jax.random.PRNGKey(0)

    # Small NCHW input consistent with typical use inside resmlp: (N, C, H, W)
    x = jax.random.normal(key, (2, 4, 16, 16), dtype=jnp.float32)
    out = jax.block_until_ready(soft_gate(x, beta=DEFAULT_BETA))
    ref = jax.nn.sigmoid(DEFAULT_BETA * x)
    assert out.shape == x.shape and out.dtype == x.dtype
    assert jnp.allclose(out, ref, atol=1e-5, rtol=1e-5)

    # Larger input to exercise the multi-tile, pipelined path (grid > 1).
    x_big = jax.random.normal(jax.random.PRNGKey(1), (4, 64, 64, 64),
                              dtype=jnp.float32)
    out_big = jax.block_until_ready(soft_gate(x_big, beta=DEFAULT_BETA))
    ref_big = jax.nn.sigmoid(DEFAULT_BETA * x_big)
    assert out_big.shape == x_big.shape and out_big.dtype == x_big.dtype
    assert jnp.allclose(out_big, ref_big, atol=1e-5, rtol=1e-5)

    # bf16 I/O path (halves bytes moved; up-cast happens inside the kernel).
    x_bf = x.astype(jnp.bfloat16)
    out_bf = jax.block_until_ready(soft_gate(x_bf, beta=DEFAULT_BETA))
    ref_bf = jax.nn.sigmoid(DEFAULT_BETA * x_bf.astype(jnp.float32))
    assert out_bf.dtype == jnp.bfloat16
    assert jnp.allclose(out_bf.astype(jnp.float32), ref_bf, atol=2e-2, rtol=2e-2)

    print("KERNEL_OK")
</pallas_src>

<mosaic_0001>
module attributes {stable_mosaic.version = 11 : i64} {
  func.func @_soft_gate_kernel(%arg0: i32, %arg1: memref<8x1024xf32, #tpu.memory_space<vmem>>, %arg2: memref<8x1024xf32, #tpu.memory_space<vmem>>) attributes {dimension_semantics = [#tpu.dimension_semantics<parallel>], iteration_bounds = array<i64: 1>, scalar_prefetch = 0 : i64, scratch_operands = 0 : i64, tpu.core_type = #tpu.core_type<tc>, window_params = [{transform_indices = @transform_0, window_bounds = array<i64: 8, 1024>}, {transform_indices = @transform_1, window_bounds = array<i64: 8, 1024>}]} {
    %c0 = arith.constant 0 : index
    %c0_0 = arith.constant 0 : index
    %0 = vector.load %arg1[%c0, %c0_0] : memref<8x1024xf32, #tpu.memory_space<vmem>>, vector<8x1024xf32>
    %cst = arith.constant 1.000000e+02 : f32
    %1 = vector.broadcast %cst : f32 to vector<8x1024xf32>
    %2 = arith.mulf %1, %0 : vector<8x1024xf32>
    %3 = arith.negf %2 : vector<8x1024xf32>
    %4 = math.exp %3 : vector<8x1024xf32>
    %cst_1 = arith.constant 1.000000e+00 : f32
    %5 = vector.broadcast %cst_1 : f32 to vector<8x1024xf32>
    %6 = arith.addf %5, %4 : vector<8x1024xf32>
    %7 = arith.divf %5, %6 : vector<8x1024xf32>
    %c0_2 = arith.constant 0 : index
    %c0_3 = arith.constant 0 : index
    %8 = vector.load %arg2[%c0_2, %c0_3] : memref<8x1024xf32, #tpu.memory_space<vmem>>, vector<8x1024xf32>
    tpu.vector_store %arg2[%c0_2, %c0_3], %7 {strides = array<i32>} : memref<8x1024xf32, #tpu.memory_space<vmem>>, vector<8x1024xf32>,
    return
  }
  func.func @transform_0(%arg0: i32) -> (i32, i32) {
    %c0_i32 = arith.constant 0 : i32
    %c0_i32_0 = arith.constant 0 : i32
    return %arg0, %c0_i32 : i32, i32
  }
  func.func @transform_1(%arg0: i32) -> (i32, i32) {
    %c0_i32 = arith.constant 0 : i32
    %c0_i32_0 = arith.constant 0 : i32
    return %arg0, %c0_i32 : i32, i32
  }
}

</mosaic_0001>

<llo_original>
// kernel: tpu_custom_call.1
$region0: #{tpu_custom_call.1}
  #allocation0 [shape = 'u32[]', space=smem, size = 0x4, offset = 0x4, fixed_abs, tag = 'smem constant byte address 0x4 - core index']
  #allocation1 [shape = 'u32[144,128]{1,0:T(1,128)}', space=vmem, size = 0x12000, scoped, tag = 'internal scratch']
  %s0 = inlined_call_operand.hbm [shape: f32[8,1024], index: 0, kind: input, shape index: {}, may-alias: {0,1}]
  %s1 = inlined_call_operand.hbm [shape: f32[8,1024], index: 1, kind: output, shape index: {}, may-alias: {0,1}]
  %s2 = sld [smem:[#allocation0]]
  $region18: #{tpu_custom_call.1} parent=0
    _
  %s4 = ssub.s32 1, %s2
  %s5 = scalar_select 0, %s4, %s2
  $region1: #{tpu_custom_call.1} parent=0
    #allocation2 [shape = 'u8[32768]{0}', space=vmem, size = 0x8000, scoped, tag = 'input window, operand 0, single buffered']
    #allocation3 [shape = 's32[1]{0}', space=sflag, size = 0x4, scoped, tag = 'scoped memory for tpu_custom_call.1']
    #allocation4 [shape = 's32[1]{0}', space=sflag, size = 0x4, scoped, tag = 'scoped memory for tpu_custom_call.1']
    #allocation5 [shape = 'u8[32768]{0}', space=vmem, size = 0x8000, scoped, tag = 'output window, operand 0, single buffered']
    %6 = vsyncpa [#allocation3], 0
    %7 = vsyncpa [#allocation4], 0
    // Predicated region
    $region2: #{tpu_custom_call.1} parent=1 // pred_check
      _
    $region3: #{tpu_custom_call.1} parent=1 // pred_check_branch
      %9 = sbr.rel (0) target = $region5
    $region4: #{tpu_custom_call.1} parent=1 // pred_region
      %s11 = ssub.s32 1024, 1024
      %12 = vsyncadd [#allocation3], %s11
      %s14 = sshll.u32 [#allocation2], 4
      %s15 = int_to_ptr.vmem [resolvable:$true] %s14
      %17 = dma.hbm_to_vmem [thread:$0]  %s0, 1024, %s15, [#allocation3]
    $region5: #{tpu_custom_call.1} parent=1 // pred_fallthru
      _
    // Predicated region
    $region6: #{tpu_custom_call.1} parent=1 // pred_check
      _
    $region7: #{tpu_custom_call.1} parent=1 // pred_check_branch
      %19 = sbr.rel (0) target = $region9
    $region8: #{tpu_custom_call.1} parent=1 // pred_region
      %20 = dma.done [#allocation3], 1024
    $region9: #{tpu_custom_call.1} parent=1 // pred_fallthru
      _
    %v21 = vld [vmem:[#allocation2] sm:$0xff]
    %v22 = vld [vmem:[#allocation2 + $0x8] sm:$0xff]
    %v23 = vld [vmem:[#allocation2 + $0x10] sm:$0xff]
    %v24 = vld [vmem:[#allocation2 + $0x18] sm:$0xff]
    %v25 = vld [vmem:[#allocation2 + $0x20] sm:$0xff]
    %v26 = vld [vmem:[#allocation2 + $0x28] sm:$0xff]
    %v27 = vld [vmem:[#allocation2 + $0x30] sm:$0xff]
    %v28 = vld [vmem:[#allocation2 + $0x38] sm:$0xff]
    %v29 = vmul.f32 %v21, 100.0
    %v30 = vmul.f32 %v22, 100.0
    %v31 = vmul.f32 %v23, 100.0
    %v32 = vmul.f32 %v24, 100.0
    %v33 = vmul.f32 %v25, 100.0
    %v34 = vmul.f32 %v26, 100.0
    %v35 = vmul.f32 %v27, 100.0
    %v36 = vmul.f32 %v28, 100.0
    %v37 = vxor.u32 %v29, 2147483648
    %v38 = vxor.u32 %v30, 2147483648
    %v39 = vxor.u32 %v31, 2147483648
    %v40 = vxor.u32 %v32, 2147483648
    %v41 = vxor.u32 %v33, 2147483648
    %v42 = vxor.u32 %v34, 2147483648
    %v43 = vxor.u32 %v35, 2147483648
    %v44 = vxor.u32 %v36, 2147483648
    %v45 = vmul.f32 %v37, 1.442695
    %v46 = vpow.pop %v45
    %v47 = vmul.f32 %v38, 1.442695
    %v48 = vpow.pop %v47
    %v49 = vmul.f32 %v39, 1.442695
    %v50 = vpow.pop %v49
    %v51 = vmul.f32 %v40, 1.442695
    %v52 = vpow.pop %v51
    %v53 = vmul.f32 %v41, 1.442695
    %v54 = vpow.pop %v53
    %v55 = vmul.f32 %v42, 1.442695
    %v56 = vpow.pop %v55
    %v57 = vmul.f32 %v43, 1.442695
    %v58 = vpow.pop %v57
    %v59 = vmul.f32 %v44, 1.442695
    %v60 = vpow.pop %v59
    %v61 = vadd.f32 %v46, 1.0
    %v62 = vadd.f32 %v48, 1.0
    %v63 = vadd.f32 %v50, 1.0
    %v64 = vadd.f32 %v52, 1.0
    %v65 = vadd.f32 %v54, 1.0
    %v66 = vadd.f32 %v56, 1.0
    %v67 = vadd.f32 %v58, 1.0
    %v68 = vadd.f32 %v60, 1.0
    %v69 = vrcp.pop %v61
    %v70 = vmul.f32 1.0, %v69
    %v71 = vrcp.pop %v62
    %v72 = vmul.f32 1.0, %v71
    %v73 = vrcp.pop %v63
    %v74 = vmul.f32 1.0, %v73
    %v75 = vrcp.pop %v64
    %v76 = vmul.f32 1.0, %v75
    %v77 = vrcp.pop %v65
    %v78 = vmul.f32 1.0, %v77
    %v79 = vrcp.pop %v66
    %v80 = vmul.f32 1.0, %v79
    %v81 = vrcp.pop %v67
    %v82 = vmul.f32 1.0, %v81
    %v83 = vrcp.pop %v68
    %v84 = vmul.f32 1.0, %v83
    %85 = vst [vmem:[#allocation5] sm:$0xff] %v70
    %86 = vst [vmem:[#allocation5 + $0x8] sm:$0xff] %v72
    %87 = vst [vmem:[#allocation5 + $0x10] sm:$0xff] %v74
    %88 = vst [vmem:[#allocation5 + $0x18] sm:$0xff] %v76
    %89 = vst [vmem:[#allocation5 + $0x20] sm:$0xff] %v78
    %90 = vst [vmem:[#allocation5 + $0x28] sm:$0xff] %v80
    %91 = vst [vmem:[#allocation5 + $0x30] sm:$0xff] %v82
    %92 = vst [vmem:[#allocation5 + $0x38] sm:$0xff] %v84
    // Predicated region
    $region10: #{tpu_custom_call.1} parent=1 // pred_check
      _
    $region11: #{tpu_custom_call.1} parent=1 // pred_check_branch
      %94 = sbr.rel (0) target = $region13
    $region12: #{tpu_custom_call.1} parent=1 // pred_region
      %s96 = ssub.s32 1024, 1024
      %97 = vsyncadd [#allocation4], %s96
      %s99 = sshll.u32 [#allocation5], 4
      %s100 = int_to_ptr.vmem [resolvable:$true] %s99
      %102 = dma.vmem_to_hbm [thread:$0]  %s100, 1024, %s1, [#allocation4]
    $region13: #{tpu_custom_call.1} parent=1 // pred_fallthru
      _
    // Predicated region
    $region14: #{tpu_custom_call.1} parent=1 // pred_check
      _
    $region15: #{tpu_custom_call.1} parent=1 // pred_check_branch
      %104 = sbr.rel (0) target = $region17
    $region16: #{tpu_custom_call.1} parent=1 // pred_region
      %105 = dma.done [#allocation4], 1024
    $region17: #{tpu_custom_call.1} parent=1 // pred_fallthru
      _
    %106 = vsyncpa [#allocation3], 1
    %107 = vsyncpa [#allocation4], 1

</llo_original>
